<compile_context>
chip_gen: v5e
topology: v5e:2x2
jax: 0.10.0
libtpu: 0.0.40
codegen_flags: <defaults>
</compile_context>

<pallas_src>
import math

import jax
import jax.numpy as jnp
from jax.experimental import pallas as pl
from jax.experimental.pallas import tpu as pltpu


def _attention_pool_kernel(x_ref, wqkv_ref, pos0_ref, possp_ref, oh_ref,
                           oht_ref, wc_ref, bc_ref, o_ref):
    # x_ref   : (TB, HW, C)  bf16  token block for TB batch elements
    # wqkv_ref: (C, 3E)      bf16  [Wq*scale | Wk | Wv]
    # pos0_ref: (1, 3E)      f32   mean-token positional projection (+biases)
    # possp_ref:(HW, 2E)     f32   spatial positional projections, [K | V] parts
    # oh_ref  : (E, H)       f32   block one-hot (per-head lane reduction)
    # oht_ref : (H, E)       f32   its transpose (per-head lane expansion)
    # wc_ref  : (E, O_pad)   bf16  output projection (lane-padded)
    # bc_ref  : (1, O_pad)   f32
    # o_ref   : (TB, O_pad)  f32
    TB, HW, C = x_ref.shape
    E, H = oh_ref.shape

    x = x_ref[...]                                            # (TB, HW, C)
    # Single fat projection matmul: batch folded into M (MXU-friendly).
    proj = jnp.dot(x.reshape(TB * HW, C), wqkv_ref[...],
                   preferred_element_type=jnp.float32)        # (TB*HW, 3E)
    proj = proj.reshape(TB, HW, 3 * E)

    # Mean-token projections via linearity: mean(x) @ W == mean(x @ W).
    mean_proj = jnp.mean(proj, axis=1)                        # (TB, 3E)
    pos0 = pos0_ref[...]                                      # (1, 3E)
    q = mean_proj[:, :E] + pos0[:, :E]                        # (TB, E) pre-scaled
    k0 = mean_proj[:, E:2 * E] + pos0[:, E:2 * E]             # (TB, E)
    v0 = mean_proj[:, 2 * E:] + pos0[:, 2 * E:]               # (TB, E)

    # Spatial-token K|V (positional projection added post-matmul, broadcast
    # over the batch tile).
    kv_sp = proj[:, :, E:] + possp_ref[...]                   # (TB, HW, 2E)
    k_sp = kv_sp[:, :, :E]                                    # (TB, HW, E)
    v_sp = kv_sp[:, :, E:]                                    # (TB, HW, E)

    # Head-batched scores: elementwise q*k, reduce each head's D lanes with a
    # block one-hot matmul (stays lane-dense at width E on the big operands).
    oh = oh_ref[...]                                          # (E, H)
    s0 = jnp.dot(q * k0, oh, preferred_element_type=jnp.float32)       # (TB, H)
    s_sp = jnp.dot((k_sp * q[:, None, :]).reshape(TB * HW, E), oh,
                   preferred_element_type=jnp.float32)
    s_sp = s_sp.reshape(TB, HW, H)                            # (TB, HW, H)

    # Online-style softmax over the L = HW + 1 keys (mean token handled
    # without a concat).  Normalization is deferred to the very end.
    m = jnp.maximum(jnp.max(s_sp, axis=1), s0)                # (TB, H)
    e0 = jnp.exp(s0 - m)                                      # (TB, H)
    e_sp = jnp.exp(s_sp - m[:, None, :])                      # (TB, HW, H)
    inv = pl.reciprocal(e0 + jnp.sum(e_sp, axis=1), approx=True)        # (TB, H)

    # Expand per-head weights back to E lanes and combine with V; apply the
    # softmax denominator once on the (TB, E) result.
    oht = oht_ref[...]                                        # (H, E)
    e0e = jnp.dot(e0, oht, preferred_element_type=jnp.float32)          # (TB, E)
    espe = jnp.dot(e_sp.reshape(TB * HW, H), oht,
                   preferred_element_type=jnp.float32).reshape(TB, HW, E)
    inv_e = jnp.dot(inv, oht, preferred_element_type=jnp.float32)       # (TB, E)
    attn = (e0e * v0 + jnp.sum(espe * v_sp, axis=1)) * inv_e  # (TB, E)

    out = jnp.dot(attn.astype(wc_ref.dtype), wc_ref[...],
                  preferred_element_type=jnp.float32) + bc_ref[...]     # (TB, O_pad)
    o_ref[...] = out.astype(o_ref.dtype)


def _pick_batch_tile(n):
    # Whole batch in one step for small N; otherwise a multiple-of-8 divisor
    # (keeps the (TB, O_pad) output block legal and the grid well balanced).
    if n <= 32:
        return n
    for tb in (32, 24, 16, 8):
        if n % tb == 0:
            return tb
    return n


def attention_pool2d(x_nchw, params, num_heads):
    N, C, H, W = x_nchw.shape
    HW = H * W
    E = C
    D = E // num_heads
    O = params["wc"].shape[0]
    O_pad = pl.cdiv(O, 128) * 128
    scale = 1.0 / math.sqrt(D)

    # Layout plumbing (outside the kernel): NCHW -> (N, HW, C) token layout;
    # bf16 matmul inputs with f32 accumulation inside the kernel.
    x_tok = x_nchw.reshape(N, C, HW).transpose(0, 2, 1).astype(jnp.bfloat16)

    # Fused Q|K|V weight (C, 3E), query scale folded into the Q block.
    w_qkv = jnp.concatenate(
        [params["wq"].T * scale, params["wk"].T, params["wv"].T],
        axis=1).astype(jnp.bfloat16)

    # Positional-embedding projections (incl. biases) precomputed in f32.
    pos = params["pos"]
    pos_q = (pos @ params["wq"].T + params["bq"]) * scale
    pos_k = pos @ params["wk"].T + params["bk"]
    pos_v = pos @ params["wv"].T + params["bv"]
    pos_all = jnp.concatenate([pos_q, pos_k, pos_v], axis=1)   # (L, 3E) f32
    pos0 = pos_all[0:1, :]                                     # mean-token row
    pos_sp = pos_all[1:, E:]                                   # (HW, 2E) K|V only

    # Block one-hot head reduce / expand matrices.
    head_id = jnp.arange(E, dtype=jnp.int32) // D
    oh = (head_id[:, None] == jnp.arange(num_heads)[None, :]).astype(jnp.float32)
    oht = oh.T

    # Lane-padded output projection (keeps the output store unmasked/dense).
    wc = jnp.zeros((E, O_pad), jnp.float32).at[:, :O].set(
        params["wc"].T).astype(jnp.bfloat16)
    bc = jnp.zeros((1, O_pad), jnp.float32).at[:, :O].set(
        params["bc"].reshape(1, O))

    TB = _pick_batch_tile(N)
    grid = (N // TB,)
    inv2 = lambda i: (0, 0)     # grid-invariant operands stay resident in VMEM
    inv3 = lambda i: (0, 0, 0)

    out = pl.pallas_call(
        _attention_pool_kernel,
        out_shape=jax.ShapeDtypeStruct((N, O_pad), jnp.float32),
        grid=grid,
        in_specs=[
            pl.BlockSpec((TB, HW, C), lambda i: (i, 0, 0)),   # x tokens, TB batches
            pl.BlockSpec((C, 3 * E), inv2),                   # fused Wqkv
            pl.BlockSpec((1, 3 * E), inv2),                   # mean-token pos proj
            pl.BlockSpec((HW, 2 * E), inv2),                  # spatial pos proj
            pl.BlockSpec((E, num_heads), inv2),               # head one-hot
            pl.BlockSpec((num_heads, E), inv2),               # head one-hot^T
            pl.BlockSpec((E, O_pad), inv2),                   # Wc (padded)
            pl.BlockSpec((1, O_pad), inv2),                   # bc (padded)
        ],
        out_specs=pl.BlockSpec((TB, O_pad), lambda i: (i, 0)),
        compiler_params=pltpu.CompilerParams(
            dimension_semantics=("parallel",),
            vmem_limit_bytes=48 * 1024 * 1024),
    )(x_tok, w_qkv, pos0, pos_sp, oh, oht, wc, bc)
    return out[:, :O]


def init_params(key, spacial_dim, embed_dim, output_dim):
    ks = jax.random.split(key, 9)
    L = spacial_dim ** 2 + 1
    pos = jax.random.normal(ks[0], (L, embed_dim), jnp.float32) / embed_dim ** 0.5

    def lin(kw, kb, out_f, in_f):
        bound = 1.0 / math.sqrt(in_f)
        w = jax.random.uniform(kw, (out_f, in_f), jnp.float32, -bound, bound)
        b = jax.random.uniform(kb, (out_f,), jnp.float32, -bound, bound)
        return w, b

    wq, bq = lin(ks[1], ks[2], embed_dim, embed_dim)
    wk, bk = lin(ks[3], ks[4], embed_dim, embed_dim)
    wv, bv = lin(ks[5], ks[6], embed_dim, embed_dim)
    wc, bc = lin(ks[7], ks[8], output_dim, embed_dim)
    return dict(pos=pos, wq=wq, bq=bq, wk=wk, bk=bk, wv=wv, bv=bv, wc=wc, bc=bc)


def reference(x_nchw, params, num_heads):
    # Pure-JAX (f32) mirror of F.multi_head_attention_forward semantics.
    N, C, H, W = x_nchw.shape
    HW, E = H * W, C
    D = E // num_heads
    x = x_nchw.reshape(N, C, HW).transpose(2, 0, 1)                  # (HW, N, C)
    x = jnp.concatenate([x.mean(axis=0, keepdims=True), x], axis=0)  # (L, N, C)
    x = x + params["pos"][:, None, :]
    L = x.shape[0]
    q = (x[0:1] @ params["wq"].T + params["bq"]) * (D ** -0.5)       # (1, N, E)
    k = x @ params["wk"].T + params["bk"]                            # (L, N, E)
    v = x @ params["wv"].T + params["bv"]
    qh = q.reshape(1, N, num_heads, D)
    kh = k.reshape(L, N, num_heads, D)
    vh = v.reshape(L, N, num_heads, D)
    s = jnp.einsum('qnhd,lnhd->nhql', qh, kh)
    p = jax.nn.softmax(s, axis=-1)
    o = jnp.einsum('nhql,lnhd->qnhd', p, vh).reshape(1, N, E)
    return (o @ params["wc"].T + params["bc"])[0]                    # (N, O)


if __name__ == "__main__":
    spacial_dim = 4      # H = W = 4  -> 16 spatial tokens + 1 mean token
    embed_dim = 32
    num_heads = 4
    output_dim = 32
    batch = 2

    key = jax.random.PRNGKey(0)
    k_x, k_p = jax.random.split(key)
    x = jax.random.normal(k_x, (batch, embed_dim, spacial_dim, spacial_dim),
                          jnp.float32)
    params = init_params(k_p, spacial_dim, embed_dim, output_dim)

    out = attention_pool2d(x, params, num_heads)
    out = jax.block_until_ready(out)

    ref = reference(x, params, num_heads)
    assert out.shape == (batch, output_dim)
    # bf16 matmul inputs (f32 accumulation) -> loosened tolerance vs f32 ref.
    assert jnp.allclose(out, ref, atol=5e-2, rtol=5e-2), \
        f"max err {jnp.max(jnp.abs(out - ref))}"
    print("KERNEL_OK")
</pallas_src>

<mosaic_0001>
module attributes {stable_mosaic.version = 11 : i64} {
  func.func @_attention_pool_kernel(%arg0: i32, %arg1: memref<2x16x32xbf16, #tpu.memory_space<vmem>>, %arg2: memref<32x96xbf16, #tpu.memory_space<vmem>>, %arg3: memref<1x96xf32, #tpu.memory_space<vmem>>, %arg4: memref<16x64xf32, #tpu.memory_space<vmem>>, %arg5: memref<32x4xf32, #tpu.memory_space<vmem>>, %arg6: memref<4x32xf32, #tpu.memory_space<vmem>>, %arg7: memref<32x128xbf16, #tpu.memory_space<vmem>>, %arg8: memref<1x128xf32, #tpu.memory_space<vmem>>, %arg9: memref<2x128xf32, #tpu.memory_space<vmem>>) attributes {dimension_semantics = [#tpu.dimension_semantics<parallel>], iteration_bounds = array<i64: 1>, scalar_prefetch = 0 : i64, scratch_operands = 0 : i64, tpu.core_type = #tpu.core_type<tc>, window_params = [{transform_indices = @transform_0, window_bounds = array<i64: 2, 16, 32>}, {pipeline_mode = #tpu.pipeline_mode<synchronous>, transform_indices = @transform_1, window_bounds = array<i64: 32, 96>}, {pipeline_mode = #tpu.pipeline_mode<synchronous>, transform_indices = @transform_2, window_bounds = array<i64: 1, 96>}, {pipeline_mode = #tpu.pipeline_mode<synchronous>, transform_indices = @transform_3, window_bounds = array<i64: 16, 64>}, {pipeline_mode = #tpu.pipeline_mode<synchronous>, transform_indices = @transform_4, window_bounds = array<i64: 32, 4>}, {pipeline_mode = #tpu.pipeline_mode<synchronous>, transform_indices = @transform_5, window_bounds = array<i64: 4, 32>}, {pipeline_mode = #tpu.pipeline_mode<synchronous>, transform_indices = @transform_6, window_bounds = array<i64: 32, 128>}, {pipeline_mode = #tpu.pipeline_mode<synchronous>, transform_indices = @transform_7, window_bounds = array<i64: 1, 128>}, {transform_indices = @transform_8, window_bounds = array<i64: 2, 128>}]} {
    %c0 = arith.constant 0 : index
    %c0_0 = arith.constant 0 : index
    %c0_1 = arith.constant 0 : index
    %0 = vector.load %arg1[%c0, %c0_0, %c0_1] : memref<2x16x32xbf16, #tpu.memory_space<vmem>>, vector<2x16x32xbf16>
    %1 = vector.shape_cast %0 : vector<2x16x32xbf16> to vector<32x32xbf16>
    %c0_2 = arith.constant 0 : index
    %c0_3 = arith.constant 0 : index
    %2 = vector.load %arg2[%c0_2, %c0_3] : memref<32x96xbf16, #tpu.memory_space<vmem>>, vector<32x96xbf16>
    %cst = arith.constant dense<0.000000e+00> : vector<32x96xf32>
    %3 = tpu.matmul %1, %2, %cst {dimension_numbers = #tpu.dot_dimension_numbers<[1], [0], [0], [1], [0, 0, 1, 1], [], []>} : vector<32x32xbf16>, vector<32x96xbf16>, vector<32x96xf32> -> vector<32x96xf32>
    %4 = vector.shape_cast %3 : vector<32x96xf32> to vector<2x16x96xf32>
    %cst_4 = arith.constant dense<0.000000e+00> : vector<2x96xf32>
    %5 = vector.multi_reduction <add>, %4, %cst_4 [1] : vector<2x16x96xf32> to vector<2x96xf32>
    %cst_5 = arith.constant 1.600000e+01 : f32
    %6 = vector.broadcast %cst_5 : f32 to vector<2x96xf32>
    %7 = arith.divf %5, %6 : vector<2x96xf32>
    %c0_6 = arith.constant 0 : index
    %c0_7 = arith.constant 0 : index
    %8 = vector.load %arg3[%c0_6, %c0_7] : memref<1x96xf32, #tpu.memory_space<vmem>>, vector<1x96xf32>
    %9 = vector.extract_strided_slice %7 {offsets = [0, 0], sizes = [2, 32], strides = [1, 1]} : vector<2x96xf32> to vector<2x32xf32>
    %10 = vector.extract_strided_slice %8 {offsets = [0, 0], sizes = [1, 32], strides = [1, 1]} : vector<1x96xf32> to vector<1x32xf32>
    %11 = vector.broadcast %10 : vector<1x32xf32> to vector<2x32xf32>
    %12 = arith.addf %9, %11 : vector<2x32xf32>
    %13 = vector.extract_strided_slice %7 {offsets = [0, 32], sizes = [2, 32], strides = [1, 1]} : vector<2x96xf32> to vector<2x32xf32>
    %14 = vector.extract_strided_slice %8 {offsets = [0, 32], sizes = [1, 32], strides = [1, 1]} : vector<1x96xf32> to vector<1x32xf32>
    %15 = vector.broadcast %14 : vector<1x32xf32> to vector<2x32xf32>
    %16 = arith.addf %13, %15 : vector<2x32xf32>
    %17 = vector.extract_strided_slice %7 {offsets = [0, 64], sizes = [2, 32], strides = [1, 1]} : vector<2x96xf32> to vector<2x32xf32>
    %18 = vector.extract_strided_slice %8 {offsets = [0, 64], sizes = [1, 32], strides = [1, 1]} : vector<1x96xf32> to vector<1x32xf32>
    %19 = vector.broadcast %18 : vector<1x32xf32> to vector<2x32xf32>
    %20 = arith.addf %17, %19 : vector<2x32xf32>
    %21 = vector.extract_strided_slice %4 {offsets = [0, 0, 32], sizes = [2, 16, 64], strides = [1, 1, 1]} : vector<2x16x96xf32> to vector<2x16x64xf32>
    %c0_8 = arith.constant 0 : index
    %c0_9 = arith.constant 0 : index
    %22 = vector.load %arg4[%c0_8, %c0_9] : memref<16x64xf32, #tpu.memory_space<vmem>>, vector<16x64xf32>
    %23 = vector.shape_cast %22 : vector<16x64xf32> to vector<1x16x64xf32>
    %24 = vector.broadcast %23 : vector<1x16x64xf32> to vector<2x16x64xf32>
    %25 = arith.addf %21, %24 : vector<2x16x64xf32>
    %26 = vector.extract_strided_slice %25 {offsets = [0, 0, 0], sizes = [2, 16, 32], strides = [1, 1, 1]} : vector<2x16x64xf32> to vector<2x16x32xf32>
    %27 = vector.extract_strided_slice %25 {offsets = [0, 0, 32], sizes = [2, 16, 32], strides = [1, 1, 1]} : vector<2x16x64xf32> to vector<2x16x32xf32>
    %c0_10 = arith.constant 0 : index
    %c0_11 = arith.constant 0 : index
    %28 = vector.load %arg5[%c0_10, %c0_11] : memref<32x4xf32, #tpu.memory_space<vmem>>, vector<32x4xf32>
    %29 = arith.mulf %12, %16 : vector<2x32xf32>
    %cst_12 = arith.constant dense<0.000000e+00> : vector<2x4xf32>
    %30 = tpu.matmul %29, %28, %cst_12 {dimension_numbers = #tpu.dot_dimension_numbers<[1], [0], [0], [1], [0, 0, 1, 1], [], []>} : vector<2x32xf32>, vector<32x4xf32>, vector<2x4xf32> -> vector<2x4xf32>
    %31 = vector.shape_cast %12 : vector<2x32xf32> to vector<2x1x32xf32>
    %32 = vector.broadcast %31 : vector<2x1x32xf32> to vector<2x16x32xf32>
    %33 = arith.mulf %26, %32 : vector<2x16x32xf32>
    %34 = vector.shape_cast %33 : vector<2x16x32xf32> to vector<32x32xf32>
    %cst_13 = arith.constant dense<0.000000e+00> : vector<32x4xf32>
    %35 = tpu.matmul %34, %28, %cst_13 {dimension_numbers = #tpu.dot_dimension_numbers<[1], [0], [0], [1], [0, 0, 1, 1], [], []>} : vector<32x32xf32>, vector<32x4xf32>, vector<32x4xf32> -> vector<32x4xf32>
    %36 = vector.shape_cast %35 : vector<32x4xf32> to vector<2x16x4xf32>
    %cst_14 = arith.constant dense<0xFF800000> : vector<2x4xf32>
    %37 = vector.multi_reduction <maximumf>, %36, %cst_14 [1] : vector<2x16x4xf32> to vector<2x4xf32>
    %38 = arith.maximumf %37, %30 : vector<2x4xf32>
    %39 = arith.subf %30, %38 : vector<2x4xf32>
    %40 = math.exp %39 : vector<2x4xf32>
    %41 = vector.shape_cast %38 : vector<2x4xf32> to vector<2x1x4xf32>
    %42 = vector.broadcast %41 : vector<2x1x4xf32> to vector<2x16x4xf32>
    %43 = arith.subf %36, %42 : vector<2x16x4xf32>
    %44 = math.exp %43 : vector<2x16x4xf32>
    %cst_15 = arith.constant dense<0.000000e+00> : vector<2x4xf32>
    %45 = vector.multi_reduction <add>, %44, %cst_15 [1] : vector<2x16x4xf32> to vector<2x4xf32>
    %46 = arith.addf %40, %45 : vector<2x4xf32>
    %47 = tpu.reciprocal %46 {approx = true} : vector<2x4xf32> -> vector<2x4xf32>
    %c0_16 = arith.constant 0 : index
    %c0_17 = arith.constant 0 : index
    %48 = vector.load %arg6[%c0_16, %c0_17] : memref<4x32xf32, #tpu.memory_space<vmem>>, vector<4x32xf32>
    %cst_18 = arith.constant dense<0.000000e+00> : vector<2x32xf32>
    %49 = tpu.matmul %40, %48, %cst_18 {dimension_numbers = #tpu.dot_dimension_numbers<[1], [0], [0], [1], [0, 0, 1, 1], [], []>} : vector<2x4xf32>, vector<4x32xf32>, vector<2x32xf32> -> vector<2x32xf32>
    %50 = vector.shape_cast %44 : vector<2x16x4xf32> to vector<32x4xf32>
    %cst_19 = arith.constant dense<0.000000e+00> : vector<32x32xf32>
    %51 = tpu.matmul %50, %48, %cst_19 {dimension_numbers = #tpu.dot_dimension_numbers<[1], [0], [0], [1], [0, 0, 1, 1], [], []>} : vector<32x4xf32>, vector<4x32xf32>, vector<32x32xf32> -> vector<32x32xf32>
    %52 = vector.shape_cast %51 : vector<32x32xf32> to vector<2x16x32xf32>
    %cst_20 = arith.constant dense<0.000000e+00> : vector<2x32xf32>
    %53 = tpu.matmul %47, %48, %cst_20 {dimension_numbers = #tpu.dot_dimension_numbers<[1], [0], [0], [1], [0, 0, 1, 1], [], []>} : vector<2x4xf32>, vector<4x32xf32>, vector<2x32xf32> -> vector<2x32xf32>
    %54 = arith.mulf %49, %20 : vector<2x32xf32>
    %55 = arith.mulf %52, %27 : vector<2x16x32xf32>
    %cst_21 = arith.constant dense<0.000000e+00> : vector<2x32xf32>
    %56 = vector.multi_reduction <add>, %55, %cst_21 [1] : vector<2x16x32xf32> to vector<2x32xf32>
    %57 = arith.addf %54, %56 : vector<2x32xf32>
    %58 = arith.mulf %57, %53 : vector<2x32xf32>
    %59 = arith.truncf %58 : vector<2x32xf32> to vector<2x32xbf16>
    %c0_22 = arith.constant 0 : index
    %c0_23 = arith.constant 0 : index
    %60 = vector.load %arg7[%c0_22, %c0_23] : memref<32x128xbf16, #tpu.memory_space<vmem>>, vector<32x128xbf16>
    %cst_24 = arith.constant dense<0.000000e+00> : vector<2x128xf32>
    %61 = tpu.matmul %59, %60, %cst_24 {dimension_numbers = #tpu.dot_dimension_numbers<[1], [0], [0], [1], [0, 0, 1, 1], [], []>} : vector<2x32xbf16>, vector<32x128xbf16>, vector<2x128xf32> -> vector<2x128xf32>
    %c0_25 = arith.constant 0 : index
    %c0_26 = arith.constant 0 : index
    %62 = vector.load %arg8[%c0_25, %c0_26] : memref<1x128xf32, #tpu.memory_space<vmem>>, vector<1x128xf32>
    %63 = vector.broadcast %62 : vector<1x128xf32> to vector<2x128xf32>
    %64 = arith.addf %61, %63 : vector<2x128xf32>
    %c0_27 = arith.constant 0 : index
    %c0_28 = arith.constant 0 : index
    %65 = vector.load %arg9[%c0_27, %c0_28] : memref<2x128xf32, #tpu.memory_space<vmem>>, vector<2x128xf32>
    tpu.vector_store %arg9[%c0_27, %c0_28], %64 {strides = array<i32>} : memref<2x128xf32, #tpu.memory_space<vmem>>, vector<2x128xf32>,
    return
  }
  func.func @transform_0(%arg0: i32) -> (i32, i32, i32) {
    %c0_i32 = arith.constant 0 : i32
    %c0_i32_0 = arith.constant 0 : i32
    %c0_i32_1 = arith.constant 0 : i32
    return %arg0, %c0_i32, %c0_i32_0 : i32, i32, i32
  }
  func.func @transform_1(%arg0: i32) -> (i32, i32) {
    %c0_i32 = arith.constant 0 : i32
    %c0_i32_0 = arith.constant 0 : i32
    %c0_i32_1 = arith.constant 0 : i32
    return %c0_i32, %c0_i32_0 : i32, i32
  }
  func.func @transform_2(%arg0: i32) -> (i32, i32) {
    %c0_i32 = arith.constant 0 : i32
    %c0_i32_0 = arith.constant 0 : i32
    %c0_i32_1 = arith.constant 0 : i32
    return %c0_i32, %c0_i32_0 : i32, i32
  }
  func.func @transform_3(%arg0: i32) -> (i32, i32) {
    %c0_i32 = arith.constant 0 : i32
    %c0_i32_0 = arith.constant 0 : i32
    %c0_i32_1 = arith.constant 0 : i32
    return %c0_i32, %c0_i32_0 : i32, i32
  }
  func.func @transform_4(%arg0: i32) -> (i32, i32) {
    %c0_i32 = arith.constant 0 : i32
    %c0_i32_0 = arith.constant 0 : i32
    %c0_i32_1 = arith.constant 0 : i32
    return %c0_i32, %c0_i32_0 : i32, i32
  }
  func.func @transform_5(%arg0: i32) -> (i32, i32) {
    %c0_i32 = arith.constant 0 : i32
    %c0_i32_0 = arith.constant 0 : i32
    %c0_i32_1 = arith.constant 0 : i32
    return %c0_i32, %c0_i32_0 : i32, i32
  }
  func.func @transform_6(%arg0: i32) -> (i32, i32) {
    %c0_i32 = arith.constant 0 : i32
    %c0_i32_0 = arith.constant 0 : i32
    %c0_i32_1 = arith.constant 0 : i32
    return %c0_i32, %c0_i32_0 : i32, i32
  }
  func.func @transform_7(%arg0: i32) -> (i32, i32) {
    %c0_i32 = arith.constant 0 : i32
    %c0_i32_0 = arith.constant 0 : i32
    %c0_i32_1 = arith.constant 0 : i32
    return %c0_i32, %c0_i32_0 : i32, i32
  }
  func.func @transform_8(%arg0: i32) -> (i32, i32) {
    %c0_i32 = arith.constant 0 : i32
    %c0_i32_0 = arith.constant 0 : i32
    return %arg0, %c0_i32 : i32, i32
  }
}

</mosaic_0001>

<llo_original>
// kernel: tpu_custom_call.1
$region0: #{tpu_custom_call.1}
  #allocation0 [shape = 'u32[]', space=smem, size = 0x4, offset = 0x4, fixed_abs, tag = 'smem constant byte address 0x4 - core index']
  #allocation1 [shape = 'u32[72,128]{1,0:T(1,128)}', space=vmem, size = 0x9000, scoped, tag = 'internal scratch']
  %s0 = inlined_call_operand.vmem [shape: bf16[2,16,32], index: 0, kind: input, shape index: {}]
  %s1 = inlined_call_operand.vmem [shape: bf16[32,96], index: 1, kind: input, shape index: {}]
  %s2 = inlined_call_operand.vmem [shape: f32[1,96], index: 2, kind: input, shape index: {}]
  %s3 = inlined_call_operand.hbm [shape: f32[16,64], index: 3, kind: input, shape index: {}]
  %s4 = inlined_call_operand.vmem [shape: f32[32,4], index: 4, kind: input, shape index: {}]
  %s5 = inlined_call_operand.vmem [shape: f32[4,32], index: 5, kind: input, shape index: {}]
  %s6 = inlined_call_operand.hbm [shape: bf16[32,128], index: 6, kind: input, shape index: {}]
  %s7 = inlined_call_operand.vmem [shape: f32[1,128], index: 7, kind: input, shape index: {}]
  %s8 = inlined_call_operand.hbm [shape: f32[2,128], index: 8, kind: output, shape index: {}]
  %s9 = sld [smem:[#allocation0]]
  $region50: #{tpu_custom_call.1} parent=0
    _
  %s11 = ssub.s32 1, %s9
  %s12 = scalar_select 0, %s11, %s9
  $region1: #{tpu_custom_call.1} parent=0
    #allocation2 [shape = 'u8[8192]{0}', space=vmem, size = 0x2000, scoped, tag = 'input window, operand 3, single buffered']
    #allocation3 [shape = 's32[1]{0}', space=sflag, size = 0x4, scoped, tag = 'scoped memory for tpu_custom_call.1']
    #allocation4 [shape = 's32[1]{0}', space=sflag, size = 0x4, scoped, tag = 'scoped memory for tpu_custom_call.1']
    #allocation5 [shape = 'u8[8192]{0}', space=vmem, size = 0x2000, scoped, tag = 'input window, operand 6, single buffered']
    #allocation6 [shape = 's32[1]{0}', space=sflag, size = 0x4, scoped, tag = 'scoped memory for tpu_custom_call.1']
    #allocation7 [shape = 'u8[1024]{0}', space=vmem, size = 0x400, scoped, tag = 'output window, operand 0, single buffered']
    %13 = vsyncpa [#allocation3], 0
    %14 = vsyncpa [#allocation6], 0
    %15 = vsyncpa [#allocation4], 0
    // Predicated region
    $region2: #{tpu_custom_call.1} parent=1 // pred_check
      _
    $region3: #{tpu_custom_call.1} parent=1 // pred_check_branch
      %17 = sbr.rel (0) target = $region5
    $region4: #{tpu_custom_call.1} parent=1 // pred_region
      _
    $region5: #{tpu_custom_call.1} parent=1 // pred_fallthru
      _
    // Predicated region
    $region6: #{tpu_custom_call.1} parent=1 // pred_check
      _
    $region7: #{tpu_custom_call.1} parent=1 // pred_check_branch
      %19 = sbr.rel (0) target = $region9
    $region8: #{tpu_custom_call.1} parent=1 // pred_region
      _
    $region9: #{tpu_custom_call.1} parent=1 // pred_fallthru
      _
    // Predicated region
    $region10: #{tpu_custom_call.1} parent=1 // pred_check
      _
    $region11: #{tpu_custom_call.1} parent=1 // pred_check_branch
      %21 = sbr.rel (0) target = $region13
    $region12: #{tpu_custom_call.1} parent=1 // pred_region
      _
    $region13: #{tpu_custom_call.1} parent=1 // pred_fallthru
      _
    // Predicated region
    $region14: #{tpu_custom_call.1} parent=1 // pred_check
      _
    $region15: #{tpu_custom_call.1} parent=1 // pred_check_branch
      %23 = sbr.rel (0) target = $region17
    $region16: #{tpu_custom_call.1} parent=1 // pred_region
      %25 = vsyncadd [#allocation3], 0
      %s26 = sshll.u32 %s3, 4
      %s27 = int_to_ptr.hbm [resolvable:$true] %s26
      %s28 = sshll.u32 [#allocation2], 4
      %s29 = int_to_ptr.vmem [resolvable:$true] %s28
      %34 = dma.hbm_to_vmem [thread:$0]  %s27, 256, %s29, [#allocation3], 128, 128, 8
    $region17: #{tpu_custom_call.1} parent=1 // pred_fallthru
      _
    // Predicated region
    $region18: #{tpu_custom_call.1} parent=1 // pred_check
      _
    $region19: #{tpu_custom_call.1} parent=1 // pred_check_branch
      %36 = sbr.rel (0) target = $region21
    $region20: #{tpu_custom_call.1} parent=1 // pred_region
      _
    $region21: #{tpu_custom_call.1} parent=1 // pred_fallthru
      _
    // Predicated region
    $region22: #{tpu_custom_call.1} parent=1 // pred_check
      _
    $region23: #{tpu_custom_call.1} parent=1 // pred_check_branch
      %38 = sbr.rel (0) target = $region25
    $region24: #{tpu_custom_call.1} parent=1 // pred_region
      _
    $region25: #{tpu_custom_call.1} parent=1 // pred_fallthru
      _
    // Predicated region
    $region26: #{tpu_custom_call.1} parent=1 // pred_check
      _
    $region27: #{tpu_custom_call.1} parent=1 // pred_check_branch
      %40 = sbr.rel (0) target = $region29
    $region28: #{tpu_custom_call.1} parent=1 // pred_region
      %42 = vsyncadd [#allocation6], 0
      %s43 = sshll.u32 %s6, 4
      %s44 = int_to_ptr.hbm [resolvable:$true] %s43
      %s45 = sshll.u32 [#allocation5], 4
      %s46 = int_to_ptr.vmem [resolvable:$true] %s45
      %51 = dma.hbm_to_vmem [thread:$0]  %s44, 256, %s46, [#allocation6], 64, 64, 4
    $region29: #{tpu_custom_call.1} parent=1 // pred_fallthru
      _
    // Predicated region
    $region30: #{tpu_custom_call.1} parent=1 // pred_check
      _
    $region31: #{tpu_custom_call.1} parent=1 // pred_check_branch
      %53 = sbr.rel (0) target = $region33
    $region32: #{tpu_custom_call.1} parent=1 // pred_region
      _
    $region33: #{tpu_custom_call.1} parent=1 // pred_fallthru
      _
    // Predicated region
    $region34: #{tpu_custom_call.1} parent=1 // pred_check
      _
    $region35: #{tpu_custom_call.1} parent=1 // pred_check_branch
      %55 = sbr.rel (0) target = $region37
    $region36: #{tpu_custom_call.1} parent=1 // pred_region
      %57 = dma.done [#allocation3], 256
    $region37: #{tpu_custom_call.1} parent=1 // pred_fallthru
      _
    // Predicated region
    $region38: #{tpu_custom_call.1} parent=1 // pred_check
      _
    $region39: #{tpu_custom_call.1} parent=1 // pred_check_branch
      %59 = sbr.rel (0) target = $region41
    $region40: #{tpu_custom_call.1} parent=1 // pred_region
      %61 = dma.done [#allocation6], 256
    $region41: #{tpu_custom_call.1} parent=1 // pred_fallthru
      _
    %v63 = vld [vmem:[%s0] sm:$0xf]
    %v64 = vld [vmem:[%s0 + $0x4] sm:$0xf]
    %v65 = vld [vmem:[%s0 + $0x8] sm:$0xf]
    %v66 = vld [vmem:[%s0 + $0xc] sm:$0xf]
    %v67 = vld [vmem:[%s1] sm:$0xf]
    %v68 = vld [vmem:[%s1 + $0x4] sm:$0xf]
    %v69 = vld [vmem:[%s1 + $0x8] sm:$0xf]
    %v70 = vld [vmem:[%s1 + $0xc] sm:$0xf]
    %v75 = vunpack.c.l.b16 %v63
    %v76 = vunpack.c.l.b16 %v64
    %v77 = vunpack.c.l.b16 %v65
    %v78 = vunpack.c.l.b16 %v66
    %v79 = vpack.c.b16 %v76, %v75
    %v80 = vpack.c.b16 %v78, %v77
    %v85 = vunpack.c.l.b16 %v67
    %v86 = vunpack.c.l.b16 %v68
    %v87 = vunpack.c.l.b16 %v69
    %v88 = vunpack.c.l.b16 %v70
    %v89 = vpack.c.b16 %v86, %v85
    %v90 = vpack.c.b16 %v88, %v87
    %vm93 = vcmask 261120
    %v95 = vsel %vm93, %v79, 0
    %v98 = vsel %vm93, %v80, 0
    %100 = vmatpush.bf16.msra.mxu0 0
    %101 = vmatpush.bf16.msra.mxu0 0
    %102 = vmatpush.bf16.msra.mxu0 0
    %103 = vmatpush.bf16.msra.mxu0 0
    %104 = vmatpush.bf16.msra.mxu0 0
    %105 = vmatpush.bf16.msra.mxu0 0
    %106 = vmatpush.bf16.msra.mxu0 %v90
    %107 = vmatpush.bf16.msra.mxu0 %v89
    %108 = vmatmul.bf16.gmra.mxu0 %v95
    %v109 = vpop.f32.mrf.mxu0
    %v110 = vadd.f32 0.0, %v109
    %v111 = vpop.f32.mrf.mxu0
    %v112 = vadd.f32 0.0, %v111
    %113 = vmatmul.bf16.gmra.mxu0 %v98
    %v114 = vpop.f32.mrf.mxu0
    %v115 = vadd.f32 0.0, %v114
    %v116 = vpop.f32.mrf.mxu0
    %v117 = vadd.f32 0.0, %v116
    %118 = vdwg.mxu0
    %vm119 = vcmask 785408
    %v120 = vsel %vm119, %v110, 0.0
    %v121 = vsel %vm119, %v112, 0.0
    %v122 = vadd.f32 %v120, %v121
    %v123 = vrot.slane %v122, 4
    %v124 = vadd.f32 %v122, %v123
    %v125 = vrot.slane %v124, 2
    %v126 = vadd.f32 %v124, %v125
    %v127 = vrot.slane %v126, 1
    %v128 = vadd.f32 %v126, %v127
    %v129 = vsel %vm119, %v115, 0.0
    %v130 = vsel %vm119, %v117, 0.0
    %v131 = vadd.f32 %v129, %v130
    %v132 = vrot.slane %v131, 4
    %v133 = vadd.f32 %v131, %v132
    %v134 = vrot.slane %v133, 2
    %v135 = vadd.f32 %v133, %v134
    %v136 = vrot.slane %v135, 1
    %v137 = vadd.f32 %v135, %v136
    %v138 = vrcp.pop 16.0
    %v139 = vmul.f32 16.0, %v138
    %v140 = vsub.f32 1.0, %v139
    %v141 = vmul.f32 %v138, %v140
    %v142 = vadd.f32 %v138, %v141
    %vm143 = vweird.f32 %v138
    %v144 = vsel %vm143, %v138, %v142
    %v145 = vmul.f32 %v128, %v144
    %v146 = vmul.f32 %v137, %v144
    %v147 = vld [vmem:[%s2] sm:$0x1]
    %v149 = vperm.slane %v147, 0
    %v151 = vadd.f32 %v145, %v149
    %v152 = vadd.f32 %v146, %v149
    %v153 = vld [vmem:[#allocation2] sm:$0xff]
    %v154 = vld [vmem:[#allocation2 + $0x8] sm:$0xff]
    %157 = vrot.lane.b32.xlu0 %v153, 32
    %v158 = vpop.permute.xlu0 %157
    %159 = vrot.lane.b32.xlu0 %v154, 32
    %v160 = vpop.permute.xlu0 %159
    %v163 = vadd.f32 %v110, %v158
    %v164 = vadd.f32 %v112, %v160
    %v165 = vadd.f32 %v115, %v158
    %v166 = vadd.f32 %v117, %v160
    %v167 = vld [vmem:[%s4] sm:$0xff]
    %v168 = vld [vmem:[%s4 + $0x8] sm:$0xff]
    %v169 = vld [vmem:[%s4 + $0x10] sm:$0xff]
    %v170 = vld [vmem:[%s4 + $0x18] sm:$0xff]
    %173 = vrot.lane.b32.xlu0 %v151, 96
    %v174 = vpop.permute.xlu0 %173
    %175 = vrot.lane.b32.xlu0 %v152, 96
    %v176 = vpop.permute.xlu0 %175
    %v179 = vmul.f32 %v151, %v174
    %v180 = vmul.f32 %v152, %v176
    %v183 = vrot.slane %v180, 7
    %vm184 = vcmask 1041409
    %v185 = vsel %vm184, %v183, %v179
    %v186 = vsel %vm93, %v185, 0
    %188 = vmatpush.msra.mxu0 0.0
    %189 = vmatpush.msra.mxu0 0.0
    %190 = vmatpush.msra.mxu0 0.0
    %191 = vmatpush.msra.mxu0 0.0
    %192 = vmatpush.msra.mxu0 0.0
    %193 = vmatpush.msra.mxu0 0.0
    %194 = vmatpush.msra.mxu0 0.0
    %195 = vmatpush.msra.mxu0 0.0
    %196 = vmatpush.msra.mxu0 0.0
    %197 = vmatpush.msra.mxu0 0.0
    %198 = vmatpush.msra.mxu0 0.0
    %199 = vmatpush.msra.mxu0 0.0
    %200 = vmatpush.msra.mxu0 %v170
    %201 = vmatpush.msra.mxu0 %v169
    %202 = vmatpush.msra.mxu0 %v168
    %203 = vmatpush.msra.mxu0 %v167
    %204 = vmatmul.f32.gmra.mxu0 %v186
    %v205 = vpop.f32.mrf.mxu0
    %v206 = vadd.f32 0.0, %v205
    %207 = vdwg.mxu0
    %v208 = vperm.slane %v151, 0
    %v209 = vperm.slane %v152, 0
    %212 = vrot.lane.b32.xlu0 %v208, 32
    %v213 = vpop.permute.xlu0 %212
    %214 = vrot.lane.b32.xlu0 %v209, 32
    %v215 = vpop.permute.xlu0 %214
    %v218 = vmul.f32 %v163, %v213
    %v219 = vmul.f32 %v164, %v213
    %v220 = vmul.f32 %v165, %v215
    %v221 = vmul.f32 %v166, %v215
    %226 = vrot.lane.b32.xlu0 %v218, 96
    %v227 = vpop.permute.xlu0 %226
    %228 = vrot.lane.b32.xlu0 %v219, 96
    %v229 = vpop.permute.xlu0 %228
    %230 = vrot.lane.b32.xlu0 %v220, 96
    %v231 = vpop.permute.xlu0 %230
    %232 = vrot.lane.b32.xlu0 %v221, 96
    %v233 = vpop.permute.xlu0 %232
    %v234 = vsel %vm93, %v227, 0
    %v236 = vsel %vm93, %v229, 0
    %v238 = vsel %vm93, %v231, 0
    %v240 = vsel %vm93, %v233, 0
    %242 = vmatpush.msra.mxu0 0.0
    %243 = vmatpush.msra.mxu0 0.0
    %244 = vmatpush.msra.mxu0 0.0
    %245 = vmatpush.msra.mxu0 0.0
    %246 = vmatpush.msra.mxu0 0.0
    %247 = vmatpush.msra.mxu0 0.0
    %248 = vmatpush.msra.mxu0 0.0
    %249 = vmatpush.msra.mxu0 0.0
    %250 = vmatpush.msra.mxu0 0.0
    %251 = vmatpush.msra.mxu0 0.0
    %252 = vmatpush.msra.mxu0 0.0
    %253 = vmatpush.msra.mxu0 0.0
    %254 = vmatpush.msra.mxu0 %v170
    %255 = vmatpush.msra.mxu0 %v169
    %256 = vmatpush.msra.mxu0 %v168
    %257 = vmatpush.msra.mxu0 %v167
    %258 = vmatmul.f32.gmra.mxu0 %v234
    %v259 = vpop.f32.mrf.mxu0
    %v260 = vadd.f32 0.0, %v259
    %261 = vmatmul.f32.gmra.mxu0 %v236
    %v262 = vpop.f32.mrf.mxu0
    %v263 = vadd.f32 0.0, %v262
    %264 = vmatmul.f32.gmra.mxu0 %v238
    %v265 = vpop.f32.mrf.mxu0
    %v266 = vadd.f32 0.0, %v265
    %267 = vmatmul.f32.gmra.mxu0 %v240
    %v268 = vpop.f32.mrf.mxu0
    %v269 = vadd.f32 0.0, %v268
    %270 = vdwg.mxu0
    %vm271 = vcmask 31744
    %v272 = vsel %vm271, %v260, -inf
    %v273 = vsel %vm271, %v263, -inf
    %v274 = vmax.f32 %v272, %v273
    %v275 = vrot.slane %v274, 4
    %v276 = vmax.f32 %v274, %v275
    %v277 = vrot.slane %v276, 2
    %v278 = vmax.f32 %v276, %v277
    %v279 = vrot.slane %v278, 1
    %v280 = vmax.f32 %v278, %v279
    %v281 = vsel %vm271, %v266, -inf
    %v282 = vsel %vm271, %v269, -inf
    %v283 = vmax.f32 %v281, %v282
    %v284 = vrot.slane %v283, 4
    %v285 = vmax.f32 %v283, %v284
    %v286 = vrot.slane %v285, 2
    %v287 = vmax.f32 %v285, %v286
    %v288 = vrot.slane %v287, 1
    %v289 = vmax.f32 %v287, %v288
    %v291 = vrot.slane %v206, 1
    %v294 = vmax.f32 %v280, %v206
    %v295 = vmax.f32 %v289, %v291
    %v298 = vrot.slane %v295, 7
    %v299 = vsel %vm184, %v298, %v294
    %v301 = vsub.f32 %v206, %v299
    %v302 = vmul.f32 %v301, 1.442695
    %v303 = vpow.pop %v302
    %v304 = vperm.slane %v294, 0
    %v305 = vperm.slane %v295, 0
    %v306 = vsub.f32 %v260, %v304
    %v307 = vsub.f32 %v263, %v304
    %v308 = vsub.f32 %v266, %v305
    %v309 = vsub.f32 %v269, %v305
    %v310 = vmul.f32 %v306, 1.442695
    %v311 = vpow.pop %v310
    %v312 = vmul.f32 %v307, 1.442695
    %v313 = vpow.pop %v312
    %v314 = vmul.f32 %v308, 1.442695
    %v315 = vpow.pop %v314
    %v316 = vmul.f32 %v309, 1.442695
    %v317 = vpow.pop %v316
    %v318 = vsel %vm271, %v311, 0.0
    %v319 = vsel %vm271, %v313, 0.0
    %v320 = vadd.f32 %v318, %v319
    %v321 = vrot.slane %v320, 4
    %v322 = vadd.f32 %v320, %v321
    %v323 = vrot.slane %v322, 2
    %v324 = vadd.f32 %v322, %v323
    %v325 = vrot.slane %v324, 1
    %v326 = vadd.f32 %v324, %v325
    %v327 = vsel %vm271, %v315, 0.0
    %v328 = vsel %vm271, %v317, 0.0
    %v329 = vadd.f32 %v327, %v328
    %v330 = vrot.slane %v329, 4
    %v331 = vadd.f32 %v329, %v330
    %v332 = vrot.slane %v331, 2
    %v333 = vadd.f32 %v331, %v332
    %v334 = vrot.slane %v333, 1
    %v335 = vadd.f32 %v333, %v334
    %v338 = vsel %vm184, %v335, %v326
    %v340 = vadd.f32 %v303, %v338
    %v341 = vrcp.pop %v340
    %v342 = vld [vmem:[%s5] sm:$0xf]
    %v344 = vsel %vm271, %v303, 0
    %vm346 = vcmask 1043456
    %v348 = vsel %vm346, %v342, 0
    %350 = vmatpush.msra.mxu0 0.0
    %351 = vmatpush.msra.mxu0 0.0
    %352 = vmatpush.msra.mxu0 0.0
    %353 = vmatpush.msra.mxu0 0.0
    %354 = vmatpush.msra.mxu0 0.0
    %355 = vmatpush.msra.mxu0 0.0
    %356 = vmatpush.msra.mxu0 0.0
    %357 = vmatpush.msra.mxu0 0.0
    %358 = vmatpush.msra.mxu0 0.0
    %359 = vmatpush.msra.mxu0 0.0
    %360 = vmatpush.msra.mxu0 0.0
    %361 = vmatpush.msra.mxu0 0.0
    %362 = vmatpush.msra.mxu0 0.0
    %363 = vmatpush.msra.mxu0 0.0
    %364 = vmatpush.msra.mxu0 0.0
    %365 = vmatpush.msra.mxu0 %v348
    %366 = vmatmul.f32.gmra.mxu0 %v344
    %v367 = vpop.f32.mrf.mxu0
    %v368 = vadd.f32 0.0, %v367
    %369 = vdwg.mxu0
    %v371 = vsel %vm271, %v311, 0
    %v374 = vsel %vm271, %v313, 0
    %v377 = vsel %vm271, %v315, 0
    %v380 = vsel %vm271, %v317, 0
    %382 = vmatpush.msra.mxu0 0.0
    %383 = vmatpush.msra.mxu0 0.0
    %384 = vmatpush.msra.mxu0 0.0
    %385 = vmatpush.msra.mxu0 0.0
    %386 = vmatpush.msra.mxu0 0.0
    %387 = vmatpush.msra.mxu0 0.0
    %388 = vmatpush.msra.mxu0 0.0
    %389 = vmatpush.msra.mxu0 0.0
    %390 = vmatpush.msra.mxu0 0.0
    %391 = vmatpush.msra.mxu0 0.0
    %392 = vmatpush.msra.mxu0 0.0
    %393 = vmatpush.msra.mxu0 0.0
    %394 = vmatpush.msra.mxu0 0.0
    %395 = vmatpush.msra.mxu0 0.0
    %396 = vmatpush.msra.mxu0 0.0
    %397 = vmatpush.msra.mxu0 %v348
    %398 = vmatmul.f32.gmra.mxu0 %v371
    %v399 = vpop.f32.mrf.mxu0
    %v400 = vadd.f32 0.0, %v399
    %401 = vmatmul.f32.gmra.mxu0 %v374
    %v402 = vpop.f32.mrf.mxu0
    %v403 = vadd.f32 0.0, %v402
    %404 = vmatmul.f32.gmra.mxu0 %v377
    %v405 = vpop.f32.mrf.mxu0
    %v406 = vadd.f32 0.0, %v405
    %407 = vmatmul.f32.gmra.mxu0 %v380
    %v408 = vpop.f32.mrf.mxu0
    %v409 = vadd.f32 0.0, %v408
    %410 = vdwg.mxu0
    %v412 = vsel %vm271, %v341, 0
    %414 = vmatpush.msra.mxu0 0.0
    %415 = vmatpush.msra.mxu0 0.0
    %416 = vmatpush.msra.mxu0 0.0
    %417 = vmatpush.msra.mxu0 0.0
    %418 = vmatpush.msra.mxu0 0.0
    %419 = vmatpush.msra.mxu0 0.0
    %420 = vmatpush.msra.mxu0 0.0
    %421 = vmatpush.msra.mxu0 0.0
    %422 = vmatpush.msra.mxu0 0.0
    %423 = vmatpush.msra.mxu0 0.0
    %424 = vmatpush.msra.mxu0 0.0
    %425 = vmatpush.msra.mxu0 0.0
    %426 = vmatpush.msra.mxu0 0.0
    %427 = vmatpush.msra.mxu0 0.0
    %428 = vmatpush.msra.mxu0 0.0
    %429 = vmatpush.msra.mxu0 %v348
    %430 = vmatmul.f32.gmra.mxu0 %v412
    %v431 = vpop.f32.mrf.mxu0
    %v432 = vadd.f32 0.0, %v431
    %433 = vdwg.mxu0
    %v434 = vrot.slane %v152, 7
    %v435 = vsel %vm184, %v434, %v151
    %436 = vrot.lane.b32.xlu0 %v435, 64
    %v437 = vpop.permute.xlu0 %436
    %v439 = vmul.f32 %v368, %v437
    %444 = vrot.lane.b32.xlu0 %v163, 64
    %v445 = vpop.permute.xlu0 %444
    %446 = vrot.lane.b32.xlu0 %v164, 64
    %v447 = vpop.permute.xlu0 %446
    %448 = vrot.lane.b32.xlu0 %v165, 64
    %v449 = vpop.permute.xlu0 %448
    %450 = vrot.lane.b32.xlu0 %v166, 64
    %v451 = vpop.permute.xlu0 %450
    %v456 = vmul.f32 %v400, %v445
    %v457 = vmul.f32 %v403, %v447
    %v458 = vmul.f32 %v406, %v449
    %v459 = vmul.f32 %v409, %v451
    %v460 = vsel %vm93, %v456, 0.0
    %v461 = vsel %vm93, %v457, 0.0
    %v462 = vadd.f32 %v460, %v461
    %v463 = vrot.slane %v462, 4
    %v464 = vadd.f32 %v462, %v463
    %v465 = vrot.slane %v464, 2
    %v466 = vadd.f32 %v464, %v465
    %v467 = vrot.slane %v466, 1
    %v468 = vadd.f32 %v466, %v467
    %v469 = vsel %vm93, %v458, 0.0
    %v470 = vsel %vm93, %v459, 0.0
    %v471 = vadd.f32 %v469, %v470
    %v472 = vrot.slane %v471, 4
    %v473 = vadd.f32 %v471, %v472
    %v474 = vrot.slane %v473, 2
    %v475 = vadd.f32 %v473, %v474
    %v476 = vrot.slane %v475, 1
    %v477 = vadd.f32 %v475, %v476
    %v480 = vsel %vm184, %v477, %v468
    %v482 = vadd.f32 %v439, %v480
    %v483 = vmul.f32 %v482, %v432
    %v484 = vpack.c.bf16 %v483, %v483
    %v485 = vld [vmem:[#allocation5] sm:$0xf]
    %v486 = vld [vmem:[#allocation5 + $0x4] sm:$0xf]
    %v487 = vld [vmem:[#allocation5 + $0x8] sm:$0xf]
    %v488 = vld [vmem:[#allocation5 + $0xc] sm:$0xf]
    %v489 = vld [vmem:[%s7] sm:$0x1]
    %v491 = vperm.slane %v489, 0
    %v497 = vunpack.c.l.b16 %v485
    %v498 = vunpack.c.l.b16 %v486
    %v499 = vunpack.c.l.b16 %v487
    %v500 = vunpack.c.l.b16 %v488
    %v501 = vpack.c.b16 %v498, %v497
    %v502 = vpack.c.b16 %v500, %v499
    %v506 = vsel %vm93, %v484, 0
    %508 = vmatpush.bf16.msra.mxu0 0
    %509 = vmatpush.bf16.msra.mxu0 0
    %510 = vmatpush.bf16.msra.mxu0 0
    %511 = vmatpush.bf16.msra.mxu0 0
    %512 = vmatpush.bf16.msra.mxu0 0
    %513 = vmatpush.bf16.msra.mxu0 0
    %514 = vmatpush.bf16.msra.mxu0 %v502
    %515 = vmatpush.bf16.msra.mxu0 %v501
    %516 = vmatmul.bf16.gmra.mxu0 %v506
    %v517 = vpop.f32.mrf.mxu0
    %v518 = vadd.f32 %v491, %v517
    %v519 = vpop.f32.mrf.mxu0
    %520 = vdwg.mxu0
    %521 = vst [vmem:[#allocation7] sm:$0x3] %v518
    // Predicated region
    $region42: #{tpu_custom_call.1} parent=1 // pred_check
      _
    $region43: #{tpu_custom_call.1} parent=1 // pred_check_branch
      %523 = sbr.rel (0) target = $region45
    $region44: #{tpu_custom_call.1} parent=1 // pred_region
      %525 = vsyncadd [#allocation4], 0
      %s527 = sshll.u32 [#allocation7], 4
      %s528 = int_to_ptr.vmem [resolvable:$true] %s527
      %s529 = sshll.u32 %s8, 4
      %s530 = int_to_ptr.hbm [resolvable:$true] %s529
      %532 = dma.vmem_to_hbm [thread:$0]  %s528, 32, %s530, [#allocation4]
    $region45: #{tpu_custom_call.1} parent=1 // pred_fallthru
      _
    // Predicated region
    $region46: #{tpu_custom_call.1} parent=1 // pred_check
      _
    $region47: #{tpu_custom_call.1} parent=1 // pred_check_branch
      %534 = sbr.rel (0) target = $region49
    $region48: #{tpu_custom_call.1} parent=1 // pred_region
      %536 = dma.done [#allocation4], 32
    $region49: #{tpu_custom_call.1} parent=1 // pred_fallthru
      _
    %537 = vsyncpa [#allocation3], 1
    %538 = vsyncpa [#allocation6], 1
    %539 = vsyncpa [#allocation4], 1

</llo_original>
